<compile_context>
chip_gen: v7x
topology: tpu7x:2x2x1
jax: 0.10.0
libtpu: 0.0.40
codegen_flags: <defaults>
</compile_context>

<pallas_src>
import numpy as np
import jax
import jax.numpy as jnp
from jax.experimental import pallas as pl
from jax.experimental.pallas import tpu as pltpu

node_features = np.array([10, 10, 10])          # nodes per type
node_input_channels = np.array([4, 4, 4])       # input channels per type
output_channels = np.array([2, 2, 2])           # output channels per type
NUM_TYPES = 3
N = int(node_features[0])
C_IN = int(node_input_channels[0])
C_OUT = int(output_channels[0])
NT = NUM_TYPES * N                              # 30: flattened node axis (type-major)


def _s2v_kernel(x_ref, adj_ref, w1_ref, w2_ref, b_ref, wl_ref, bl_ref, out_ref):
    """Single invocation over the type-flattened graph.

    x_ref   : (NT, C_IN)          node features, type-major blocks of N rows
    adj_ref : (NT, NT)            block-diagonal adjacency, A[dst, src]
    w1_ref  : (NT, C_IN*C_OUT)    per-row self-transform weights, flat layout [k*C_OUT + c]
    w2_ref  : (NT, C_IN*C_OUT)    per-row neighbor-transform weights
    b_ref   : (NT, C_OUT)         per-row conv bias
    wl_ref  : (NT, C_OUT*C_OUT)   per-row lin1 weight ([in, out] flattened)
    bl_ref  : (NT, C_OUT)         per-row lin1 bias
    out_ref : (NT, C_OUT)
    """
    x = x_ref[...]
    w1 = w1_ref[...]
    w2 = w2_ref[...]

    # K = C_IN = 4 contractions as VPU broadcast-MACs (K far too small for the MXU;
    # this removes 6 of the 9 original matmul push/pops entirely).
    xw1 = x[:, 0:1] * w1[:, 0:C_OUT]
    xw2 = x[:, 0:1] * w2[:, 0:C_OUT]
    for k in range(1, C_IN):                    # static unroll, tiny trip count
        xw1 = xw1 + x[:, k:k + 1] * w1[:, k * C_OUT:(k + 1) * C_OUT]
        xw2 = xw2 + x[:, k:k + 1] * w2[:, k * C_OUT:(k + 1) * C_OUT]

    # The only contraction worth the MXU: block-diagonal aggregation (NT,NT)@(NT,C_OUT).
    # Note: adj @ (x @ W2) == (adj @ x) @ W2 exactly; only f32 rounding order differs.
    nbr = jnp.dot(adj_ref[...], xw2, preferred_element_type=jnp.float32)

    # structure2vec update: relu(x W1 + A x W2 + b)
    h = jnp.maximum(xw1 + nbr + b_ref[...], 0.0)

    # per-type Linear (K = C_OUT = 2 -> VPU broadcast-MAC), then EXACT sigmoid.
    wl = wl_ref[...]
    y = h[:, 0:1] * wl[:, 0:C_OUT] + bl_ref[...]
    for k in range(1, C_OUT):
        y = y + h[:, k:k + 1] * wl[:, k * C_OUT:(k + 1) * C_OUT]
    out_ref[...] = 1.0 / (1.0 + jnp.exp(-y))    # exact: EUP is idle, approx buys nothing


def s2v_net_forward(x_stack, adj_stack, params):
    """x_stack: (3, N, C_IN) f32, adj_stack: (3, N, N) f32. Returns (3, N, C_OUT)."""
    w1, w2, b, wl, bl = params

    # Flatten the type axis into type-major blocks of N rows.
    x_flat = x_stack.reshape(NT, C_IN)

    # Block-diagonal adjacency (edges only connect nodes of the same type).
    adj_bd = jnp.zeros((NT, NT), jnp.float32)
    for t in range(NUM_TYPES):
        adj_bd = adj_bd.at[t * N:(t + 1) * N, t * N:(t + 1) * N].set(adj_stack[t])

    # Per-row (type-expanded) parameters: row i carries the weights of its node type,
    # so every K<=4 contraction runs as plain VPU broadcast-MACs inside the kernel.
    w1_rows = jnp.repeat(w1.reshape(NUM_TYPES, C_IN * C_OUT), N, axis=0)   # (NT, 8)
    w2_rows = jnp.repeat(w2.reshape(NUM_TYPES, C_IN * C_OUT), N, axis=0)   # (NT, 8)
    b_rows = jnp.repeat(b.reshape(NUM_TYPES, C_OUT), N, axis=0)            # (NT, 2)
    wl_rows = jnp.repeat(wl.reshape(NUM_TYPES, C_OUT * C_OUT), N, axis=0)  # (NT, 4)
    bl_rows = jnp.repeat(bl.reshape(NUM_TYPES, C_OUT), N, axis=0)          # (NT, 2)

    args = (x_flat, adj_bd, w1_rows, w2_rows, b_rows, wl_rows, bl_rows)

    # Whole-array-in-VMEM specs, no grid: one invocation, one set of DMAs.
    vmem = lambda: pl.BlockSpec(memory_space=pltpu.MemorySpace.VMEM)

    flops = (2 * NT * C_IN * C_OUT * 2      # x@W1 and x@W2 (VPU MACs)
             + 2 * NT * NT * C_OUT          # adj_bd @ (x@W2) (MXU)
             + 2 * NT * C_OUT * C_OUT)      # lin1 (VPU MACs)
    bytes_accessed = (sum(int(np.prod(a.shape)) * 4 for a in args) + NT * C_OUT * 4)

    out_flat = pl.pallas_call(
        _s2v_kernel,
        out_shape=jax.ShapeDtypeStruct((NT, C_OUT), jnp.float32),
        in_specs=[vmem() for _ in args],
        out_specs=vmem(),
        cost_estimate=pl.CostEstimate(
            flops=flops,
            transcendentals=NT * C_OUT,     # one exp per output
            bytes_accessed=bytes_accessed),
    )(*args)

    return out_flat.reshape(NUM_TYPES, N, C_OUT)


def build_adjacency(edge_index_list):
    """edge_index_list: list of 3 int arrays (2, E_t); A[t][dst, src] += 1."""
    adjs = []
    for t in range(NUM_TYPES):
        ei = edge_index_list[t]
        src, dst = ei[0], ei[1]
        A = jnp.zeros((N, N), jnp.float32).at[dst, src].add(1.0)
        adjs.append(A)
    return jnp.stack(adjs, axis=0)


def init_params():
    """Deterministic parameter init (matches the __init__ shapes)."""
    key = jax.random.PRNGKey(42)
    ks = jax.random.split(key, 5)
    w1 = 0.1 * jax.random.normal(ks[0], (NUM_TYPES, C_IN, C_OUT), jnp.float32)
    w2 = 0.1 * jax.random.normal(ks[1], (NUM_TYPES, C_IN, C_OUT), jnp.float32)
    b = 0.1 * jax.random.normal(ks[2], (NUM_TYPES, 1, C_OUT), jnp.float32)
    # torch Linear stores (out, in); generate that way then transpose to (in, out)
    wl_t = 0.1 * jax.random.normal(ks[3], (NUM_TYPES, C_OUT, C_OUT), jnp.float32)
    wl = jnp.transpose(wl_t, (0, 2, 1))
    bl = 0.1 * jax.random.normal(ks[4], (NUM_TYPES, 1, C_OUT), jnp.float32)
    return w1, w2, b, wl, bl


def reference_forward(x_stack, adj_stack, params):
    w1, w2, b, wl, bl = params
    agg = jnp.einsum("tnm,tmc->tnc", adj_stack, x_stack)
    h = jnp.maximum(
        jnp.einsum("tnc,tco->tno", x_stack, w1)
        + jnp.einsum("tnc,tco->tno", agg, w2) + b, 0.0)
    y = jnp.einsum("tno,top->tnp", h, wl) + bl
    return jax.nn.sigmoid(y)


if __name__ == "__main__":
    key = jax.random.PRNGKey(0)
    kx, ke = jax.random.split(key)

    # node features per type: list of (10, 4) -> stacked (3, 10, 4)
    x_list = [jax.random.normal(jax.random.fold_in(kx, t), (N, C_IN), jnp.float32)
              for t in range(NUM_TYPES)]
    x_stack = jnp.stack(x_list, axis=0)

    # deterministic per-type edge lists (2, E)
    edge_index_list = []
    for t in range(NUM_TYPES):
        E = 20
        ek = jax.random.fold_in(ke, t)
        src = jax.random.randint(jax.random.fold_in(ek, 0), (E,), 0, N)
        dst = jax.random.randint(jax.random.fold_in(ek, 1), (E,), 0, N)
        edge_index_list.append(jnp.stack([src, dst], axis=0))

    adj_stack = build_adjacency(edge_index_list)
    params = init_params()

    out = s2v_net_forward(x_stack, adj_stack, params)
    out = jax.block_until_ready(out)

    ref = jax.block_until_ready(reference_forward(x_stack, adj_stack, params))
    # Exact sigmoid now; remaining differences are f32 rounding-order only
    # (adj@(x@W2) vs (adj@x)@W2, sequential VPU MACs vs dot reduction).
    np.testing.assert_allclose(np.asarray(out), np.asarray(ref), rtol=1e-4, atol=1e-5)

    print("KERNEL_OK")
</pallas_src>

<mosaic_0001>
module attributes {stable_mosaic.version = 11 : i64} {
  func.func @_s2v_kernel(%arg0: memref<30x4xf32, #tpu.memory_space<vmem>>, %arg1: memref<30x30xf32, #tpu.memory_space<vmem>>, %arg2: memref<30x8xf32, #tpu.memory_space<vmem>>, %arg3: memref<30x8xf32, #tpu.memory_space<vmem>>, %arg4: memref<30x2xf32, #tpu.memory_space<vmem>>, %arg5: memref<30x4xf32, #tpu.memory_space<vmem>>, %arg6: memref<30x2xf32, #tpu.memory_space<vmem>>, %arg7: memref<30x2xf32, #tpu.memory_space<vmem>>) attributes {dimension_semantics = [], scalar_prefetch = 0 : i64, scratch_operands = 0 : i64, tpu.core_type = #tpu.core_type<tc>} {
    %c0 = arith.constant 0 : index
    %c0_0 = arith.constant 0 : index
    %0 = vector.load %arg0[%c0, %c0_0] : memref<30x4xf32, #tpu.memory_space<vmem>>, vector<30x4xf32>
    %c0_1 = arith.constant 0 : index
    %c0_2 = arith.constant 0 : index
    %1 = vector.load %arg2[%c0_1, %c0_2] : memref<30x8xf32, #tpu.memory_space<vmem>>, vector<30x8xf32>
    %c0_3 = arith.constant 0 : index
    %c0_4 = arith.constant 0 : index
    %2 = vector.load %arg3[%c0_3, %c0_4] : memref<30x8xf32, #tpu.memory_space<vmem>>, vector<30x8xf32>
    %3 = vector.extract_strided_slice %0 {offsets = [0, 0], sizes = [30, 1], strides = [1, 1]} : vector<30x4xf32> to vector<30x1xf32>
    %4 = vector.extract_strided_slice %1 {offsets = [0, 0], sizes = [30, 2], strides = [1, 1]} : vector<30x8xf32> to vector<30x2xf32>
    %5 = vector.broadcast %3 : vector<30x1xf32> to vector<30x2xf32>
    %6 = arith.mulf %5, %4 : vector<30x2xf32>
    %7 = vector.extract_strided_slice %0 {offsets = [0, 0], sizes = [30, 1], strides = [1, 1]} : vector<30x4xf32> to vector<30x1xf32>
    %8 = vector.extract_strided_slice %2 {offsets = [0, 0], sizes = [30, 2], strides = [1, 1]} : vector<30x8xf32> to vector<30x2xf32>
    %9 = vector.broadcast %7 : vector<30x1xf32> to vector<30x2xf32>
    %10 = arith.mulf %9, %8 : vector<30x2xf32>
    %11 = vector.extract_strided_slice %0 {offsets = [0, 1], sizes = [30, 1], strides = [1, 1]} : vector<30x4xf32> to vector<30x1xf32>
    %12 = vector.extract_strided_slice %1 {offsets = [0, 2], sizes = [30, 2], strides = [1, 1]} : vector<30x8xf32> to vector<30x2xf32>
    %13 = vector.broadcast %11 : vector<30x1xf32> to vector<30x2xf32>
    %14 = arith.mulf %13, %12 : vector<30x2xf32>
    %15 = arith.addf %6, %14 : vector<30x2xf32>
    %16 = vector.extract_strided_slice %0 {offsets = [0, 1], sizes = [30, 1], strides = [1, 1]} : vector<30x4xf32> to vector<30x1xf32>
    %17 = vector.extract_strided_slice %2 {offsets = [0, 2], sizes = [30, 2], strides = [1, 1]} : vector<30x8xf32> to vector<30x2xf32>
    %18 = vector.broadcast %16 : vector<30x1xf32> to vector<30x2xf32>
    %19 = arith.mulf %18, %17 : vector<30x2xf32>
    %20 = arith.addf %10, %19 : vector<30x2xf32>
    %21 = vector.extract_strided_slice %0 {offsets = [0, 2], sizes = [30, 1], strides = [1, 1]} : vector<30x4xf32> to vector<30x1xf32>
    %22 = vector.extract_strided_slice %1 {offsets = [0, 4], sizes = [30, 2], strides = [1, 1]} : vector<30x8xf32> to vector<30x2xf32>
    %23 = vector.broadcast %21 : vector<30x1xf32> to vector<30x2xf32>
    %24 = arith.mulf %23, %22 : vector<30x2xf32>
    %25 = arith.addf %15, %24 : vector<30x2xf32>
    %26 = vector.extract_strided_slice %0 {offsets = [0, 2], sizes = [30, 1], strides = [1, 1]} : vector<30x4xf32> to vector<30x1xf32>
    %27 = vector.extract_strided_slice %2 {offsets = [0, 4], sizes = [30, 2], strides = [1, 1]} : vector<30x8xf32> to vector<30x2xf32>
    %28 = vector.broadcast %26 : vector<30x1xf32> to vector<30x2xf32>
    %29 = arith.mulf %28, %27 : vector<30x2xf32>
    %30 = arith.addf %20, %29 : vector<30x2xf32>
    %31 = vector.extract_strided_slice %0 {offsets = [0, 3], sizes = [30, 1], strides = [1, 1]} : vector<30x4xf32> to vector<30x1xf32>
    %32 = vector.extract_strided_slice %1 {offsets = [0, 6], sizes = [30, 2], strides = [1, 1]} : vector<30x8xf32> to vector<30x2xf32>
    %33 = vector.broadcast %31 : vector<30x1xf32> to vector<30x2xf32>
    %34 = arith.mulf %33, %32 : vector<30x2xf32>
    %35 = arith.addf %25, %34 : vector<30x2xf32>
    %36 = vector.extract_strided_slice %0 {offsets = [0, 3], sizes = [30, 1], strides = [1, 1]} : vector<30x4xf32> to vector<30x1xf32>
    %37 = vector.extract_strided_slice %2 {offsets = [0, 6], sizes = [30, 2], strides = [1, 1]} : vector<30x8xf32> to vector<30x2xf32>
    %38 = vector.broadcast %36 : vector<30x1xf32> to vector<30x2xf32>
    %39 = arith.mulf %38, %37 : vector<30x2xf32>
    %40 = arith.addf %30, %39 : vector<30x2xf32>
    %c0_5 = arith.constant 0 : index
    %c0_6 = arith.constant 0 : index
    %41 = vector.load %arg1[%c0_5, %c0_6] : memref<30x30xf32, #tpu.memory_space<vmem>>, vector<30x30xf32>
    %cst = arith.constant dense<0.000000e+00> : vector<30x2xf32>
    %42 = tpu.matmul %41, %40, %cst {dimension_numbers = #tpu.dot_dimension_numbers<[1], [0], [0], [1], [0, 0, 1, 1], [], []>} : vector<30x30xf32>, vector<30x2xf32>, vector<30x2xf32> -> vector<30x2xf32>
    %43 = arith.addf %35, %42 : vector<30x2xf32>
    %c0_7 = arith.constant 0 : index
    %c0_8 = arith.constant 0 : index
    %44 = vector.load %arg4[%c0_7, %c0_8] : memref<30x2xf32, #tpu.memory_space<vmem>>, vector<30x2xf32>
    %45 = arith.addf %43, %44 : vector<30x2xf32>
    %cst_9 = arith.constant 0.000000e+00 : f32
    %46 = vector.broadcast %cst_9 : f32 to vector<30x2xf32>
    %47 = arith.maximumf %45, %46 : vector<30x2xf32>
    %c0_10 = arith.constant 0 : index
    %c0_11 = arith.constant 0 : index
    %48 = vector.load %arg5[%c0_10, %c0_11] : memref<30x4xf32, #tpu.memory_space<vmem>>, vector<30x4xf32>
    %49 = vector.extract_strided_slice %47 {offsets = [0, 0], sizes = [30, 1], strides = [1, 1]} : vector<30x2xf32> to vector<30x1xf32>
    %50 = vector.extract_strided_slice %48 {offsets = [0, 0], sizes = [30, 2], strides = [1, 1]} : vector<30x4xf32> to vector<30x2xf32>
    %51 = vector.broadcast %49 : vector<30x1xf32> to vector<30x2xf32>
    %52 = arith.mulf %51, %50 : vector<30x2xf32>
    %c0_12 = arith.constant 0 : index
    %c0_13 = arith.constant 0 : index
    %53 = vector.load %arg6[%c0_12, %c0_13] : memref<30x2xf32, #tpu.memory_space<vmem>>, vector<30x2xf32>
    %54 = arith.addf %52, %53 : vector<30x2xf32>
    %55 = vector.extract_strided_slice %47 {offsets = [0, 1], sizes = [30, 1], strides = [1, 1]} : vector<30x2xf32> to vector<30x1xf32>
    %56 = vector.extract_strided_slice %48 {offsets = [0, 2], sizes = [30, 2], strides = [1, 1]} : vector<30x4xf32> to vector<30x2xf32>
    %57 = vector.broadcast %55 : vector<30x1xf32> to vector<30x2xf32>
    %58 = arith.mulf %57, %56 : vector<30x2xf32>
    %59 = arith.addf %54, %58 : vector<30x2xf32>
    %cst_14 = arith.constant 0.000000e+00 : f32
    %60 = vector.broadcast %cst_14 : f32 to vector<30x2xf32>
    %61 = arith.subf %60, %59 : vector<30x2xf32>
    %62 = math.exp %61 : vector<30x2xf32>
    %cst_15 = arith.constant 1.000000e+00 : f32
    %63 = vector.broadcast %cst_15 : f32 to vector<30x2xf32>
    %64 = arith.addf %63, %62 : vector<30x2xf32>
    %cst_16 = arith.constant 1.000000e+00 : f32
    %65 = vector.broadcast %cst_16 : f32 to vector<30x2xf32>
    %66 = arith.divf %65, %64 : vector<30x2xf32>
    %c0_17 = arith.constant 0 : index
    %c0_18 = arith.constant 0 : index
    %67 = vector.load %arg7[%c0_17, %c0_18] : memref<30x2xf32, #tpu.memory_space<vmem>>, vector<30x2xf32>
    tpu.vector_store %arg7[%c0_17, %c0_18], %66 {strides = array<i32>} : memref<30x2xf32, #tpu.memory_space<vmem>>, vector<30x2xf32>,
    return
  }
}

</mosaic_0001>

<llo_original>
// kernel: tpu_custom_call.1
$region0: #{tpu_custom_call.1}
  #allocation0 [shape = 'u32[]', space=smem, size = 0x4, offset = 0x4, fixed_abs, tag = 'smem constant byte address 0x4 - core index']
  #allocation1 [shape = 'u32[144,128]{1,0:T(1,128)}', space=vmem, size = 0x12000, scoped, tag = 'internal scratch']
  %s0 = inlined_call_operand.vmem [shape: f32[30,4], index: 0, kind: input, shape index: {}]
  %s1 = inlined_call_operand.vmem [shape: f32[30,30], index: 1, kind: input, shape index: {}]
  %s2 = inlined_call_operand.vmem [shape: f32[30,8], index: 2, kind: input, shape index: {}]
  %s3 = inlined_call_operand.vmem [shape: f32[30,8], index: 3, kind: input, shape index: {}]
  %s4 = inlined_call_operand.vmem [shape: f32[30,2], index: 4, kind: input, shape index: {}]
  %s5 = inlined_call_operand.vmem [shape: f32[30,4], index: 5, kind: input, shape index: {}]
  %s6 = inlined_call_operand.vmem [shape: f32[30,2], index: 6, kind: input, shape index: {}]
  %s7 = inlined_call_operand.vmem [shape: f32[30,2], index: 7, kind: output, shape index: {}]
  %s8 = sld [smem:[#allocation0]]
  $region38: #{tpu_custom_call.1} parent=0
    _
  %s10 = ssub.s32 1, %s8
  %s11 = scalar_select 0, %s10, %s8
  // Predicated region
  $region2: #{tpu_custom_call.1} parent=0 // pred_check
    _
  $region3: #{tpu_custom_call.1} parent=0 // pred_check_branch
    %13 = sbr.rel (0) target = $region5
  $region4: #{tpu_custom_call.1} parent=0 // pred_region
    _
  $region5: #{tpu_custom_call.1} parent=0 // pred_fallthru
    _
  // Predicated region
  $region6: #{tpu_custom_call.1} parent=0 // pred_check
    _
  $region7: #{tpu_custom_call.1} parent=0 // pred_check_branch
    %15 = sbr.rel (0) target = $region9
  $region8: #{tpu_custom_call.1} parent=0 // pred_region
    _
  $region9: #{tpu_custom_call.1} parent=0 // pred_fallthru
    _
  // Predicated region
  $region10: #{tpu_custom_call.1} parent=0 // pred_check
    _
  $region11: #{tpu_custom_call.1} parent=0 // pred_check_branch
    %17 = sbr.rel (0) target = $region13
  $region12: #{tpu_custom_call.1} parent=0 // pred_region
    _
  $region13: #{tpu_custom_call.1} parent=0 // pred_fallthru
    _
  // Predicated region
  $region14: #{tpu_custom_call.1} parent=0 // pred_check
    _
  $region15: #{tpu_custom_call.1} parent=0 // pred_check_branch
    %19 = sbr.rel (0) target = $region17
  $region16: #{tpu_custom_call.1} parent=0 // pred_region
    _
  $region17: #{tpu_custom_call.1} parent=0 // pred_fallthru
    _
  // Predicated region
  $region18: #{tpu_custom_call.1} parent=0 // pred_check
    _
  $region19: #{tpu_custom_call.1} parent=0 // pred_check_branch
    %21 = sbr.rel (0) target = $region21
  $region20: #{tpu_custom_call.1} parent=0 // pred_region
    _
  $region21: #{tpu_custom_call.1} parent=0 // pred_fallthru
    _
  // Predicated region
  $region22: #{tpu_custom_call.1} parent=0 // pred_check
    _
  $region23: #{tpu_custom_call.1} parent=0 // pred_check_branch
    %23 = sbr.rel (0) target = $region25
  $region24: #{tpu_custom_call.1} parent=0 // pred_region
    _
  $region25: #{tpu_custom_call.1} parent=0 // pred_fallthru
    _
  // Predicated region
  $region26: #{tpu_custom_call.1} parent=0 // pred_check
    _
  $region27: #{tpu_custom_call.1} parent=0 // pred_check_branch
    %25 = sbr.rel (0) target = $region29
  $region28: #{tpu_custom_call.1} parent=0 // pred_region
    _
  $region29: #{tpu_custom_call.1} parent=0 // pred_fallthru
    _
  %v26 = vld [vmem:[%s0] sm:$0xff]
  %v27 = vld [vmem:[%s0 + $0x8] sm:$0xff]
  %v28 = vld [vmem:[%s0 + $0x10] sm:$0xff]
  %v29 = vld [vmem:[%s0 + $0x18] sm:$0x3f]
  %v30 = vld [vmem:[%s2] sm:$0xff]
  %v31 = vld [vmem:[%s2 + $0x8] sm:$0xff]
  %v32 = vld [vmem:[%s2 + $0x10] sm:$0xff]
  %v33 = vld [vmem:[%s2 + $0x18] sm:$0x3f]
  %v34 = vld [vmem:[%s3] sm:$0xff]
  %v35 = vld [vmem:[%s3 + $0x8] sm:$0xff]
  %v36 = vld [vmem:[%s3 + $0x10] sm:$0xff]
  %v37 = vld [vmem:[%s3 + $0x18] sm:$0x3f]
  %39 = vset.pattern.permute.xlu0 0
  %40 = vperm.xlu0 %39, %v26
  %v41 = vpop.permute.xlu0 %40
  %44 = vset.pattern.permute.xlu0 0
  %45 = vperm.xlu0 %44, %v27
  %v46 = vpop.permute.xlu0 %45
  %49 = vset.pattern.permute.xlu0 0
  %50 = vperm.xlu0 %49, %v28
  %v51 = vpop.permute.xlu0 %50
  %54 = vset.pattern.permute.xlu0 0
  %55 = vperm.xlu0 %54, %v29
  %v56 = vpop.permute.xlu0 %55
  %v58 = vmul.f32 %v41, %v30
  %v59 = vmul.f32 %v46, %v31
  %v60 = vmul.f32 %v51, %v32
  %v61 = vmul.f32 %v56, %v33
  %v62 = vmul.f32 %v41, %v34
  %v63 = vmul.f32 %v46, %v35
  %v64 = vmul.f32 %v51, %v36
  %v65 = vmul.f32 %v56, %v37
  %66 = vset.pattern.permute.xlu0 1
  %67 = vperm.xlu0 %66, %v26
  %v68 = vpop.permute.xlu0 %67
  %70 = vset.pattern.permute.xlu0 1
  %71 = vperm.xlu0 %70, %v27
  %v72 = vpop.permute.xlu0 %71
  %74 = vset.pattern.permute.xlu0 1
  %75 = vperm.xlu0 %74, %v28
  %v76 = vpop.permute.xlu0 %75
  %78 = vset.pattern.permute.xlu0 1
  %79 = vperm.xlu0 %78, %v29
  %v80 = vpop.permute.xlu0 %79
  %v82 = vmul.f32 %v68, %v30
  %v83 = vmul.f32 %v72, %v31
  %v84 = vmul.f32 %v76, %v32
  %v85 = vmul.f32 %v80, %v33
  %90 = vrot.lane.b32.xlu0 %v82, 126
  %v91 = vpop.permute.xlu0 %90
  %92 = vrot.lane.b32.xlu0 %v83, 126
  %v93 = vpop.permute.xlu0 %92
  %94 = vrot.lane.b32.xlu0 %v84, 126
  %v95 = vpop.permute.xlu0 %94
  %96 = vrot.lane.b32.xlu0 %v85, 126
  %v97 = vpop.permute.xlu0 %96
  %v102 = vadd.f32 %v58, %v91
  %v103 = vadd.f32 %v59, %v93
  %v104 = vadd.f32 %v60, %v95
  %v105 = vadd.f32 %v61, %v97
  %v106 = vmul.f32 %v68, %v34
  %v107 = vmul.f32 %v72, %v35
  %v108 = vmul.f32 %v76, %v36
  %v109 = vmul.f32 %v80, %v37
  %114 = vrot.lane.b32.xlu0 %v106, 126
  %v115 = vpop.permute.xlu0 %114
  %116 = vrot.lane.b32.xlu0 %v107, 126
  %v117 = vpop.permute.xlu0 %116
  %118 = vrot.lane.b32.xlu0 %v108, 126
  %v119 = vpop.permute.xlu0 %118
  %120 = vrot.lane.b32.xlu0 %v109, 126
  %v121 = vpop.permute.xlu0 %120
  %v126 = vadd.f32 %v62, %v115
  %v127 = vadd.f32 %v63, %v117
  %v128 = vadd.f32 %v64, %v119
  %v129 = vadd.f32 %v65, %v121
  %130 = vset.pattern.permute.xlu0 2
  %131 = vperm.xlu0 %130, %v26
  %v132 = vpop.permute.xlu0 %131
  %134 = vset.pattern.permute.xlu0 2
  %135 = vperm.xlu0 %134, %v27
  %v136 = vpop.permute.xlu0 %135
  %138 = vset.pattern.permute.xlu0 2
  %139 = vperm.xlu0 %138, %v28
  %v140 = vpop.permute.xlu0 %139
  %142 = vset.pattern.permute.xlu0 2
  %143 = vperm.xlu0 %142, %v29
  %v144 = vpop.permute.xlu0 %143
  %v146 = vmul.f32 %v132, %v30
  %v147 = vmul.f32 %v136, %v31
  %v148 = vmul.f32 %v140, %v32
  %v149 = vmul.f32 %v144, %v33
  %154 = vrot.lane.b32.xlu0 %v146, 124
  %v155 = vpop.permute.xlu0 %154
  %156 = vrot.lane.b32.xlu0 %v147, 124
  %v157 = vpop.permute.xlu0 %156
  %158 = vrot.lane.b32.xlu0 %v148, 124
  %v159 = vpop.permute.xlu0 %158
  %160 = vrot.lane.b32.xlu0 %v149, 124
  %v161 = vpop.permute.xlu0 %160
  %v166 = vadd.f32 %v102, %v155
  %v167 = vadd.f32 %v103, %v157
  %v168 = vadd.f32 %v104, %v159
  %v169 = vadd.f32 %v105, %v161
  %v170 = vmul.f32 %v132, %v34
  %v171 = vmul.f32 %v136, %v35
  %v172 = vmul.f32 %v140, %v36
  %v173 = vmul.f32 %v144, %v37
  %178 = vrot.lane.b32.xlu0 %v170, 124
  %v179 = vpop.permute.xlu0 %178
  %180 = vrot.lane.b32.xlu0 %v171, 124
  %v181 = vpop.permute.xlu0 %180
  %182 = vrot.lane.b32.xlu0 %v172, 124
  %v183 = vpop.permute.xlu0 %182
  %184 = vrot.lane.b32.xlu0 %v173, 124
  %v185 = vpop.permute.xlu0 %184
  %v190 = vadd.f32 %v126, %v179
  %v191 = vadd.f32 %v127, %v181
  %v192 = vadd.f32 %v128, %v183
  %v193 = vadd.f32 %v129, %v185
  %194 = vset.pattern.permute.xlu0 3
  %195 = vperm.xlu0 %194, %v26
  %v196 = vpop.permute.xlu0 %195
  %198 = vset.pattern.permute.xlu0 3
  %199 = vperm.xlu0 %198, %v27
  %v200 = vpop.permute.xlu0 %199
  %202 = vset.pattern.permute.xlu0 3
  %203 = vperm.xlu0 %202, %v28
  %v204 = vpop.permute.xlu0 %203
  %206 = vset.pattern.permute.xlu0 3
  %207 = vperm.xlu0 %206, %v29
  %v208 = vpop.permute.xlu0 %207
  %v210 = vmul.f32 %v196, %v30
  %v211 = vmul.f32 %v200, %v31
  %v212 = vmul.f32 %v204, %v32
  %v213 = vmul.f32 %v208, %v33
  %218 = vrot.lane.b32.xlu0 %v210, 122
  %v219 = vpop.permute.xlu0 %218
  %220 = vrot.lane.b32.xlu0 %v211, 122
  %v221 = vpop.permute.xlu0 %220
  %222 = vrot.lane.b32.xlu0 %v212, 122
  %v223 = vpop.permute.xlu0 %222
  %224 = vrot.lane.b32.xlu0 %v213, 122
  %v225 = vpop.permute.xlu0 %224
  %v230 = vadd.f32 %v166, %v219
  %v231 = vadd.f32 %v167, %v221
  %v232 = vadd.f32 %v168, %v223
  %v233 = vadd.f32 %v169, %v225
  %v234 = vmul.f32 %v196, %v34
  %v235 = vmul.f32 %v200, %v35
  %v236 = vmul.f32 %v204, %v36
  %v237 = vmul.f32 %v208, %v37
  %242 = vrot.lane.b32.xlu0 %v234, 122
  %v243 = vpop.permute.xlu0 %242
  %244 = vrot.lane.b32.xlu0 %v235, 122
  %v245 = vpop.permute.xlu0 %244
  %246 = vrot.lane.b32.xlu0 %v236, 122
  %v247 = vpop.permute.xlu0 %246
  %248 = vrot.lane.b32.xlu0 %v237, 122
  %v249 = vpop.permute.xlu0 %248
  %v254 = vadd.f32 %v190, %v243
  %v255 = vadd.f32 %v191, %v245
  %v256 = vadd.f32 %v192, %v247
  %v257 = vadd.f32 %v193, %v249
  %v258 = vld [vmem:[%s1] sm:$0xff]
  %v259 = vld [vmem:[%s1 + $0x8] sm:$0xff]
  %v260 = vld [vmem:[%s1 + $0x10] sm:$0xff]
  %v261 = vld [vmem:[%s1 + $0x18] sm:$0x3f]
  %vm262 = vcmask 244736
  %v264 = vsel %vm262, %v258, 0
  %v267 = vsel %vm262, %v259, 0
  %v270 = vsel %vm262, %v260, 0
  %v273 = vsel %vm262, %v261, 0
  %vm275 = vcmask 1045504
  %v277 = vsel %vm275, %v257, 0
  %279 = vmatprep.subr.mxu0 0.0
  %280 = vmatpush1.msra.mxu0 %v254
  %281 = vmatprep.subr.mxu0 0.0
  %282 = vmatpush1.msra.mxu0 %v255
  %283 = vmatprep.subr.mxu0 0.0
  %284 = vmatpush1.msra.mxu0 %v256
  %285 = vmatprep.subr.mxu0 0.0
  %286 = vmatpush1.msra.mxu0 %v277
  %287 = vmatprep.subr.mxu0 0.0
  %288 = vmatpush1.msra.mxu0 0.0
  %289 = vmatprep.subr.mxu0 0.0
  %290 = vmatpush1.msra.mxu0 0.0
  %291 = vmatprep.subr.mxu0 0.0
  %292 = vmatpush1.msra.mxu0 0.0
  %293 = vmatprep.subr.mxu0 0.0
  %294 = vmatpush1.msra.mxu0 0.0
  %295 = vmatprep.subr.mxu0 0.0
  %296 = vmatpush1.msra.mxu0 0.0
  %297 = vmatprep.subr.mxu0 0.0
  %298 = vmatpush1.msra.mxu0 0.0
  %299 = vmatprep.subr.mxu0 0.0
  %300 = vmatpush1.msra.mxu0 0.0
  %301 = vmatprep.subr.mxu0 0.0
  %302 = vmatpush1.msra.mxu0 0.0
  %303 = vmatprep.subr.mxu0 0.0
  %304 = vmatpush1.msra.mxu0 0.0
  %305 = vmatprep.subr.mxu0 0.0
  %306 = vmatpush1.msra.mxu0 0.0
  %307 = vmatprep.subr.mxu0 0.0
  %308 = vmatpush1.msra.mxu0 0.0
  %309 = vmatprep.subr.mxu0 0.0
  %310 = vmatpush1.msra.mxu0 0.0
  %311 = vmatprep.subr.mxu0 0.0
  %312 = vmatpush1.msra.mxu0 0.0
  %313 = vmatprep.subr.mxu0 0.0
  %314 = vmatpush1.msra.mxu0 0.0
  %315 = vmatprep.subr.mxu0 0.0
  %316 = vmatpush1.msra.mxu0 0.0
  %317 = vmatprep.subr.mxu0 0.0
  %318 = vmatpush1.msra.mxu0 0.0
  %319 = vmatprep.subr.mxu0 0.0
  %320 = vmatpush1.msra.mxu0 0.0
  %321 = vmatprep.subr.mxu0 0.0
  %322 = vmatpush1.msra.mxu0 0.0
  %323 = vmatprep.subr.mxu0 0.0
  %324 = vmatpush1.msra.mxu0 0.0
  %325 = vmatprep.subr.mxu0 0.0
  %326 = vmatpush1.msra.mxu0 0.0
  %327 = vmatprep.subr.mxu0 0.0
  %328 = vmatpush1.msra.mxu0 0.0
  %329 = vmatprep.subr.mxu0 0.0
  %330 = vmatpush1.msra.mxu0 0.0
  %331 = vmatprep.subr.mxu0 0.0
  %332 = vmatpush1.msra.mxu0 0.0
  %333 = vmatprep.subr.mxu0 0.0
  %334 = vmatpush1.msra.mxu0 0.0
  %335 = vmatprep.subr.mxu0 0.0
  %336 = vmatpush1.msra.mxu0 0.0
  %337 = vmatprep.subr.mxu0 0.0
  %338 = vmatpush1.msra.mxu0 0.0
  %339 = vmatprep.subr.mxu0 0.0
  %340 = vmatpush1.msra.mxu0 0.0
  %341 = vmatprep.subr.mxu0 0.0
  %342 = vmatpush1.msra.mxu0 0.0
  %343 = vmatprep.mubr.f32.mxu0 0.0
  %344 = vmatmul.mubr.f32.gmra.mrb[0].mxu0 %v264
  %v345 = vpop.f32.mrb[0].mxu0
  %v346 = vadd.f32 0.0, %v345
  %v347 = vpop.f32.mrb[0].mxu0
  %348 = vmatprep.mubr.f32.mxu0 0.0
  %349 = vmatmul.mubr.f32.gmra.mrb[0].mxu0 %v267
  %v350 = vpop.f32.mrb[0].mxu0
  %v351 = vadd.f32 0.0, %v350
  %v352 = vpop.f32.mrb[0].mxu0
  %353 = vmatprep.mubr.f32.mxu0 0.0
  %354 = vmatmul.mubr.f32.gmra.mrb[0].mxu0 %v270
  %v355 = vpop.f32.mrb[0].mxu0
  %v356 = vadd.f32 0.0, %v355
  %v357 = vpop.f32.mrb[0].mxu0
  %358 = vmatprep.mubr.f32.mxu0 0.0
  %359 = vmatmul.mubr.f32.gmra.mrb[0].mxu0 %v273
  %v360 = vpop.f32.mrb[0].mxu0
  %v361 = vadd.f32 0.0, %v360
  %v362 = vpop.f32.mrb[0].mxu0
  %363 = vdwg.mxu0
  %v364 = vadd.f32 %v230, %v346
  %v365 = vadd.f32 %v231, %v351
  %v366 = vadd.f32 %v232, %v356
  %v367 = vadd.f32 %v233, %v361
  %v368 = vld [vmem:[%s4] sm:$0xff]
  %v369 = vld [vmem:[%s4 + $0x8] sm:$0xff]
  %v370 = vld [vmem:[%s4 + $0x10] sm:$0xff]
  %v371 = vld [vmem:[%s4 + $0x18] sm:$0x3f]
  %v372 = vadd.f32 %v364, %v368
  %v373 = vadd.f32 %v365, %v369
  %v374 = vadd.f32 %v366, %v370
  %v375 = vadd.f32 %v367, %v371
  %v376 = vmax.f32 %v372, 0.0
  %v377 = vmax.f32 %v373, 0.0
  %v378 = vmax.f32 %v374, 0.0
  %v379 = vmax.f32 %v375, 0.0
  %v380 = vld [vmem:[%s5] sm:$0xff]
  %v381 = vld [vmem:[%s5 + $0x8] sm:$0xff]
  %v382 = vld [vmem:[%s5 + $0x10] sm:$0xff]
  %v383 = vld [vmem:[%s5 + $0x18] sm:$0x3f]
  %385 = vset.pattern.permute.xlu0 0
  %386 = vperm.xlu0 %385, %v376
  %v387 = vpop.permute.xlu0 %386
  %390 = vset.pattern.permute.xlu0 0
  %391 = vperm.xlu0 %390, %v377
  %v392 = vpop.permute.xlu0 %391
  %395 = vset.pattern.permute.xlu0 0
  %396 = vperm.xlu0 %395, %v378
  %v397 = vpop.permute.xlu0 %396
  %400 = vset.pattern.permute.xlu0 0
  %401 = vperm.xlu0 %400, %v379
  %v402 = vpop.permute.xlu0 %401
  %v404 = vmul.f32 %v387, %v380
  %v405 = vmul.f32 %v392, %v381
  %v406 = vmul.f32 %v397, %v382
  %v407 = vmul.f32 %v402, %v383
  %v408 = vld [vmem:[%s6] sm:$0xff]
  %v409 = vld [vmem:[%s6 + $0x8] sm:$0xff]
  %v410 = vld [vmem:[%s6 + $0x10] sm:$0xff]
  %v411 = vld [vmem:[%s6 + $0x18] sm:$0x3f]
  %v412 = vadd.f32 %v404, %v408
  %v413 = vadd.f32 %v405, %v409
  %v414 = vadd.f32 %v406, %v410
  %v415 = vadd.f32 %v407, %v411
  %416 = vset.pattern.permute.xlu0 1
  %417 = vperm.xlu0 %416, %v376
  %v418 = vpop.permute.xlu0 %417
  %420 = vset.pattern.permute.xlu0 1
  %421 = vperm.xlu0 %420, %v377
  %v422 = vpop.permute.xlu0 %421
  %424 = vset.pattern.permute.xlu0 1
  %425 = vperm.xlu0 %424, %v378
  %v426 = vpop.permute.xlu0 %425
  %428 = vset.pattern.permute.xlu0 1
  %429 = vperm.xlu0 %428, %v379
  %v430 = vpop.permute.xlu0 %429
  %v432 = vmul.f32 %v418, %v380
  %v433 = vmul.f32 %v422, %v381
  %v434 = vmul.f32 %v426, %v382
  %v435 = vmul.f32 %v430, %v383
  %440 = vrot.lane.b32.xlu0 %v432, 126
  %v441 = vpop.permute.xlu0 %440
  %442 = vrot.lane.b32.xlu0 %v433, 126
  %v443 = vpop.permute.xlu0 %442
  %444 = vrot.lane.b32.xlu0 %v434, 126
  %v445 = vpop.permute.xlu0 %444
  %446 = vrot.lane.b32.xlu0 %v435, 126
  %v447 = vpop.permute.xlu0 %446
  %v452 = vadd.f32 %v412, %v441
  %v453 = vadd.f32 %v413, %v443
  %v454 = vadd.f32 %v414, %v445
  %v455 = vadd.f32 %v415, %v447
  %v456 = vsub.f32 0.0, %v452
  %v457 = vsub.f32 0.0, %v453
  %v458 = vsub.f32 0.0, %v454
  %v459 = vsub.f32 0.0, %v455
  %v460 = vmul.f32 %v456, 1.442695
  %v461 = vpow.pop %v460
  %v462 = vmul.f32 %v457, 1.442695
  %v463 = vpow.pop %v462
  %v464 = vmul.f32 %v458, 1.442695
  %v465 = vpow.pop %v464
  %v466 = vmul.f32 %v459, 1.442695
  %v467 = vpow.pop %v466
  %v468 = vadd.f32 %v461, 1.0
  %v469 = vadd.f32 %v463, 1.0
  %v470 = vadd.f32 %v465, 1.0
  %v471 = vadd.f32 %v467, 1.0
  %v472 = vrcp.pop %v468
  %v473 = vmul.f32 1.0, %v472
  %v474 = vrcp.pop %v469
  %v475 = vmul.f32 1.0, %v474
  %v476 = vrcp.pop %v470
  %v477 = vmul.f32 1.0, %v476
  %v478 = vrcp.pop %v471
  %v479 = vmul.f32 1.0, %v478
  %vm480 = vcmask 15360
  %481 = vst.msk [vmem:[%s7] sm:$0xff] %vm480, %v473
  %482 = vst.msk [vmem:[%s7 + $0x8] sm:$0xff] %vm480, %v475
  %483 = vst.msk [vmem:[%s7 + $0x10] sm:$0xff] %vm480, %v477
  %vm484 = vcmask 13312
  %485 = vst.msk [vmem:[%s7 + $0x18] sm:$0x3f] %vm484, %v479
  // Predicated region
  $region30: #{tpu_custom_call.1} parent=0 // pred_check
    _
  $region31: #{tpu_custom_call.1} parent=0 // pred_check_branch
    %487 = sbr.rel (0) target = $region33
  $region32: #{tpu_custom_call.1} parent=0 // pred_region
    _
  $region33: #{tpu_custom_call.1} parent=0 // pred_fallthru
    _
  // Predicated region
  $region34: #{tpu_custom_call.1} parent=0 // pred_check
    _
  $region35: #{tpu_custom_call.1} parent=0 // pred_check_branch
    %489 = sbr.rel (0) target = $region37
  $region36: #{tpu_custom_call.1} parent=0 // pred_region
    _
  $region37: #{tpu_custom_call.1} parent=0 // pred_fallthru
    _

</llo_original>
